<compile_context>
chip_gen: v7x
topology: tpu7x:2x2x1
jax: 0.10.0
libtpu: 0.0.40
codegen_flags: <defaults>
</compile_context>

<pallas_src>
import functools

import jax
import jax.numpy as jnp
from jax.experimental import pallas as pl
from jax.experimental.pallas import tpu as pltpu

_HIDDEN = 64    # logical hidden width (matches the PyTorch module)
_HPAD = 128     # lane-padded width used inside the kernel


def _critic_kernel(n_states, n_actions, n_outputs,
                   s_ref, a_ref, w_ref, b_ref, o_ref):
    state = s_ref[...]                      # (B, n_states)
    action = a_ref[...]                     # (B, n_actions)

    # ---- Layer 1: fused concat via split matmul against the packed weight slab ----
    h1 = jnp.dot(state, w_ref[0, 0:n_states, :],
                 preferred_element_type=jnp.float32)
    h1 = h1 + jnp.dot(action, w_ref[1, 0:n_actions, :],
                      preferred_element_type=jnp.float32)
    h1 = jnp.maximum(h1 + b_ref[0:1, :], 0.0)     # (B, 128); cols 64..127 stay 0

    # ---- Layer 2 ----
    h2 = jnp.dot(h1, w_ref[2], preferred_element_type=jnp.float32)
    h2 = jnp.maximum(h2 + b_ref[1:2, :], 0.0)     # (B, 128); cols 64..127 stay 0

    # ---- Layer 3 ----
    out = jnp.dot(h2, w_ref[3], preferred_element_type=jnp.float32) + b_ref[2:3, :]
    o_ref[...] = out[:, 0:n_outputs].astype(o_ref.dtype)


def critic_forward(state, action, packed_params, *, n_outputs):
    """Pallas-TPU forward pass of the Critic module.

    `packed_params` is the (w_slab, b_slab) pair produced once by pack_critic_params.
    """
    w_slab, b_slab = packed_params
    B, n_states = state.shape
    n_actions = action.shape[1]

    kernel = functools.partial(_critic_kernel, n_states, n_actions, n_outputs)
    vmem = pl.BlockSpec(memory_space=pltpu.MemorySpace.VMEM)
    return pl.pallas_call(
        kernel,
        out_shape=jax.ShapeDtypeStruct((B, n_outputs), jnp.float32),
        in_specs=[vmem, vmem, vmem, vmem],
        out_specs=vmem,
    )(state, action, w_slab, b_slab)


def pack_critic_params(params, n_states, n_actions):
    """One-time repack of the Linear params into two zero-padded VMEM slabs.

    params = (w1, b1, w2, b2, w3, b3), with each w_i laid out (fan_in, fan_out)
    (i.e. transposed vs. torch's nn.Linear.weight).
    """
    w1, b1, w2, b2, w3, b3 = params
    hidden = w1.shape[1]
    n_out = w3.shape[1]
    assert n_states <= _HPAD and n_actions <= _HPAD
    assert hidden <= _HPAD and n_out <= _HPAD
    assert w1.shape[0] == n_states + n_actions

    w_slab = jnp.zeros((4, _HPAD, _HPAD), jnp.float32)
    w_slab = w_slab.at[0, :n_states, :hidden].set(w1[:n_states, :])   # W1 state rows
    w_slab = w_slab.at[1, :n_actions, :hidden].set(w1[n_states:, :])  # W1 action rows
    w_slab = w_slab.at[2, :hidden, :hidden].set(w2)
    w_slab = w_slab.at[3, :hidden, :n_out].set(w3)

    b_slab = jnp.zeros((3, _HPAD), jnp.float32)
    b_slab = b_slab.at[0, :hidden].set(b1.reshape(-1))
    b_slab = b_slab.at[1, :hidden].set(b2.reshape(-1))
    b_slab = b_slab.at[2, :n_out].set(b3.reshape(-1))
    return w_slab, b_slab


def init_critic_params(key, n_states, n_actions, n_outputs=1, hidden=_HIDDEN):
    """Deterministic init mirroring torch.nn.Linear (U[-1/sqrt(fan_in), 1/sqrt(fan_in)])."""
    d_in = n_states + n_actions
    dims = [(d_in, hidden), (hidden, hidden), (hidden, n_outputs)]
    params = []
    for fan_in, fan_out in dims:
        key, kw, kb = jax.random.split(key, 3)
        bound = 1.0 / jnp.sqrt(jnp.float32(fan_in))
        w = jax.random.uniform(kw, (fan_in, fan_out), jnp.float32, -bound, bound)
        b = jax.random.uniform(kb, (1, fan_out), jnp.float32, -bound, bound)
        params.extend([w, b])
    return tuple(params)


def _critic_reference(state, action, params):
    """Pure-JAX reference of the PyTorch forward pass (for verification)."""
    w1, b1, w2, b2, w3, b3 = params
    x = jnp.concatenate([state, action], axis=1)
    h1 = jnp.maximum(x @ w1 + b1, 0.0)
    h2 = jnp.maximum(h1 @ w2 + b2, 0.0)
    return h2 @ w3 + b3


if __name__ == "__main__":
    B, N_STATES, N_ACTIONS, N_OUTPUTS = 8, 8, 4, 1

    key = jax.random.PRNGKey(0)
    k_state, k_action, k_params = jax.random.split(key, 3)

    state = jax.random.normal(k_state, (B, N_STATES), jnp.float32)
    action = jax.random.normal(k_action, (B, N_ACTIONS), jnp.float32)
    params = init_critic_params(k_params, N_STATES, N_ACTIONS, N_OUTPUTS)
    packed = pack_critic_params(params, N_STATES, N_ACTIONS)   # one-time repack

    out = critic_forward(state, action, packed, n_outputs=N_OUTPUTS)
    out = jax.block_until_ready(out)

    ref = _critic_reference(state, action, params)
    assert out.shape == (B, N_OUTPUTS), out.shape
    assert jnp.allclose(out, ref, atol=1e-4, rtol=1e-5), "mismatch vs reference"

    print("KERNEL_OK")
</pallas_src>

<mosaic_0001>
module attributes {stable_mosaic.version = 11 : i64} {
  func.func @_critic_kernel(%arg0: memref<8x8xf32, #tpu.memory_space<vmem>>, %arg1: memref<8x4xf32, #tpu.memory_space<vmem>>, %arg2: memref<4x128x128xf32, #tpu.memory_space<vmem>>, %arg3: memref<3x128xf32, #tpu.memory_space<vmem>>, %arg4: memref<8x1xf32, #tpu.memory_space<vmem>>) attributes {dimension_semantics = [], scalar_prefetch = 0 : i64, scratch_operands = 0 : i64, tpu.core_type = #tpu.core_type<tc>} {
    %c0 = arith.constant 0 : index
    %c0_0 = arith.constant 0 : index
    %0 = vector.load %arg0[%c0, %c0_0] : memref<8x8xf32, #tpu.memory_space<vmem>>, vector<8x8xf32>
    %c0_1 = arith.constant 0 : index
    %c0_2 = arith.constant 0 : index
    %1 = vector.load %arg1[%c0_1, %c0_2] : memref<8x4xf32, #tpu.memory_space<vmem>>, vector<8x4xf32>
    %c0_3 = arith.constant 0 : index
    %c0_4 = arith.constant 0 : index
    %c0_5 = arith.constant 0 : index
    %2 = vector.load %arg2[%c0_3, %c0_4, %c0_5] : memref<4x128x128xf32, #tpu.memory_space<vmem>>, vector<1x8x128xf32>
    %3 = vector.shape_cast %2 : vector<1x8x128xf32> to vector<8x128xf32>
    %cst = arith.constant dense<0.000000e+00> : vector<8x128xf32>
    %4 = tpu.matmul %0, %3, %cst {dimension_numbers = #tpu.dot_dimension_numbers<[1], [0], [0], [1], [0, 0, 1, 1], [], []>} : vector<8x8xf32>, vector<8x128xf32>, vector<8x128xf32> -> vector<8x128xf32>
    %c1 = arith.constant 1 : index
    %c0_6 = arith.constant 0 : index
    %c0_7 = arith.constant 0 : index
    %5 = vector.load %arg2[%c1, %c0_6, %c0_7] : memref<4x128x128xf32, #tpu.memory_space<vmem>>, vector<1x4x128xf32>
    %6 = vector.shape_cast %5 : vector<1x4x128xf32> to vector<4x128xf32>
    %cst_8 = arith.constant dense<0.000000e+00> : vector<8x128xf32>
    %7 = tpu.matmul %1, %6, %cst_8 {dimension_numbers = #tpu.dot_dimension_numbers<[1], [0], [0], [1], [0, 0, 1, 1], [], []>} : vector<8x4xf32>, vector<4x128xf32>, vector<8x128xf32> -> vector<8x128xf32>
    %8 = arith.addf %4, %7 : vector<8x128xf32>
    %c0_9 = arith.constant 0 : index
    %c0_10 = arith.constant 0 : index
    %9 = vector.load %arg3[%c0_9, %c0_10] : memref<3x128xf32, #tpu.memory_space<vmem>>, vector<1x128xf32>
    %10 = vector.broadcast %9 : vector<1x128xf32> to vector<8x128xf32>
    %11 = arith.addf %8, %10 : vector<8x128xf32>
    %cst_11 = arith.constant 0.000000e+00 : f32
    %12 = vector.broadcast %cst_11 : f32 to vector<8x128xf32>
    %13 = arith.maximumf %11, %12 : vector<8x128xf32>
    %c2 = arith.constant 2 : index
    %c0_12 = arith.constant 0 : index
    %c0_13 = arith.constant 0 : index
    %14 = vector.load %arg2[%c2, %c0_12, %c0_13] : memref<4x128x128xf32, #tpu.memory_space<vmem>>, vector<1x128x128xf32>
    %15 = vector.shape_cast %14 : vector<1x128x128xf32> to vector<128x128xf32>
    %cst_14 = arith.constant dense<0.000000e+00> : vector<8x128xf32>
    %16 = tpu.matmul %13, %15, %cst_14 {dimension_numbers = #tpu.dot_dimension_numbers<[1], [0], [0], [1], [0, 0, 1, 1], [], []>} : vector<8x128xf32>, vector<128x128xf32>, vector<8x128xf32> -> vector<8x128xf32>
    %c1_15 = arith.constant 1 : index
    %c0_16 = arith.constant 0 : index
    %17 = vector.load %arg3[%c1_15, %c0_16] : memref<3x128xf32, #tpu.memory_space<vmem>>, vector<1x128xf32>
    %18 = vector.broadcast %17 : vector<1x128xf32> to vector<8x128xf32>
    %19 = arith.addf %16, %18 : vector<8x128xf32>
    %cst_17 = arith.constant 0.000000e+00 : f32
    %20 = vector.broadcast %cst_17 : f32 to vector<8x128xf32>
    %21 = arith.maximumf %19, %20 : vector<8x128xf32>
    %c3 = arith.constant 3 : index
    %c0_18 = arith.constant 0 : index
    %c0_19 = arith.constant 0 : index
    %22 = vector.load %arg2[%c3, %c0_18, %c0_19] : memref<4x128x128xf32, #tpu.memory_space<vmem>>, vector<1x128x128xf32>
    %23 = vector.shape_cast %22 : vector<1x128x128xf32> to vector<128x128xf32>
    %cst_20 = arith.constant dense<0.000000e+00> : vector<8x128xf32>
    %24 = tpu.matmul %21, %23, %cst_20 {dimension_numbers = #tpu.dot_dimension_numbers<[1], [0], [0], [1], [0, 0, 1, 1], [], []>} : vector<8x128xf32>, vector<128x128xf32>, vector<8x128xf32> -> vector<8x128xf32>
    %c2_21 = arith.constant 2 : index
    %c0_22 = arith.constant 0 : index
    %25 = vector.load %arg3[%c2_21, %c0_22] : memref<3x128xf32, #tpu.memory_space<vmem>>, vector<1x128xf32>
    %26 = vector.broadcast %25 : vector<1x128xf32> to vector<8x128xf32>
    %27 = arith.addf %24, %26 : vector<8x128xf32>
    %28 = vector.extract_strided_slice %27 {offsets = [0, 0], sizes = [8, 1], strides = [1, 1]} : vector<8x128xf32> to vector<8x1xf32>
    %c0_23 = arith.constant 0 : index
    %c0_24 = arith.constant 0 : index
    %29 = vector.load %arg4[%c0_23, %c0_24] : memref<8x1xf32, #tpu.memory_space<vmem>>, vector<8x1xf32>
    tpu.vector_store %arg4[%c0_23, %c0_24], %28 {strides = array<i32>} : memref<8x1xf32, #tpu.memory_space<vmem>>, vector<8x1xf32>,
    return
  }
}

</mosaic_0001>

<llo_original>
// kernel: tpu_custom_call.1
$region0: #{tpu_custom_call.1}
  #allocation0 [shape = 'u32[]', space=smem, size = 0x4, offset = 0x4, fixed_abs, tag = 'smem constant byte address 0x4 - core index']
  #allocation1 [shape = 'u32[144,128]{1,0:T(1,128)}', space=vmem, size = 0x12000, scoped, tag = 'internal scratch']
  %s0 = inlined_call_operand.vmem [shape: f32[8,8], index: 0, kind: input, shape index: {}]
  %s1 = inlined_call_operand.vmem [shape: f32[8,4], index: 1, kind: input, shape index: {}]
  %s2 = inlined_call_operand.hbm [shape: f32[4,128,128], index: 2, kind: input, shape index: {}]
  %s3 = inlined_call_operand.vmem [shape: f32[3,128], index: 3, kind: input, shape index: {}]
  %s4 = inlined_call_operand.vmem [shape: f32[8,1], index: 4, kind: output, shape index: {}]
  %s5 = sld [smem:[#allocation0]]
  $region30: #{tpu_custom_call.1} parent=0
    _
  %s7 = ssub.s32 1, %s5
  %s8 = scalar_select 0, %s7, %s5
  $region1: #{tpu_custom_call.1} parent=0
    #allocation2 [shape = 'u8[262144]{0}', space=vmem, size = 0x40000, scoped, tag = 'input window, operand 2, single buffered']
    #allocation3 [shape = 's32[1]{0}', space=sflag, size = 0x4, scoped, tag = 'scoped memory for tpu_custom_call.1']
    %9 = vsyncpa [#allocation3], 0
    // Predicated region
    $region2: #{tpu_custom_call.1} parent=1 // pred_check
      _
    $region3: #{tpu_custom_call.1} parent=1 // pred_check_branch
      %11 = sbr.rel (0) target = $region5
    $region4: #{tpu_custom_call.1} parent=1 // pred_region
      _
    $region5: #{tpu_custom_call.1} parent=1 // pred_fallthru
      _
    // Predicated region
    $region6: #{tpu_custom_call.1} parent=1 // pred_check
      _
    $region7: #{tpu_custom_call.1} parent=1 // pred_check_branch
      %13 = sbr.rel (0) target = $region9
    $region8: #{tpu_custom_call.1} parent=1 // pred_region
      _
    $region9: #{tpu_custom_call.1} parent=1 // pred_fallthru
      _
    // Predicated region
    $region10: #{tpu_custom_call.1} parent=1 // pred_check
      _
    $region11: #{tpu_custom_call.1} parent=1 // pred_check_branch
      %15 = sbr.rel (0) target = $region13
    $region12: #{tpu_custom_call.1} parent=1 // pred_region
      %s17 = ssub.s32 8192, 8192
      %18 = vsyncadd [#allocation3], %s17
      %s19 = sshll.u32 [#allocation2], 4
      %s20 = int_to_ptr.vmem [resolvable:$true] %s19
      %25 = dma.hbm_to_vmem [thread:$0]  %s2, 8192, %s20, [#allocation3], 128, 128, 8
    $region13: #{tpu_custom_call.1} parent=1 // pred_fallthru
      _
    // Predicated region
    $region14: #{tpu_custom_call.1} parent=1 // pred_check
      _
    $region15: #{tpu_custom_call.1} parent=1 // pred_check_branch
      %27 = sbr.rel (0) target = $region17
    $region16: #{tpu_custom_call.1} parent=1 // pred_region
      _
    $region17: #{tpu_custom_call.1} parent=1 // pred_fallthru
      _
    // Predicated region
    $region18: #{tpu_custom_call.1} parent=1 // pred_check
      _
    $region19: #{tpu_custom_call.1} parent=1 // pred_check_branch
      %29 = sbr.rel (0) target = $region21
    $region20: #{tpu_custom_call.1} parent=1 // pred_region
      %30 = dma.done [#allocation3], 8192
    $region21: #{tpu_custom_call.1} parent=1 // pred_fallthru
      _
    %v31 = vld [vmem:[%s0] sm:$0xff]
    %v32 = vld [vmem:[%s1] sm:$0xff]
    %v33 = vld [vmem:[#allocation2] sm:$0xff]
    %s34 = scalar_lea.vmem [#allocation2], 128
    %v35 = vld [vmem:[%s34] sm:$0xf]
    %vm36 = vcmask 31744
    %v38 = vsel %vm36, %v32, 0
    %vm40 = vcmask 1043456
    %v42 = vsel %vm40, %v35, 0
    %44 = vmatprep.subr.mxu0 0.0
    %45 = vmatpush1.msra.mxu0 %v42
    %46 = vmatprep.subr.mxu0 0.0
    %47 = vmatpush1.msra.mxu0 0.0
    %48 = vmatprep.subr.mxu0 0.0
    %49 = vmatpush1.msra.mxu0 0.0
    %50 = vmatprep.subr.mxu0 0.0
    %51 = vmatpush1.msra.mxu0 0.0
    %52 = vmatprep.subr.mxu0 0.0
    %53 = vmatpush1.msra.mxu0 0.0
    %54 = vmatprep.subr.mxu0 0.0
    %55 = vmatpush1.msra.mxu0 0.0
    %56 = vmatprep.subr.mxu0 0.0
    %57 = vmatpush1.msra.mxu0 0.0
    %58 = vmatprep.subr.mxu0 0.0
    %59 = vmatpush1.msra.mxu0 0.0
    %60 = vmatprep.subr.mxu0 0.0
    %61 = vmatpush1.msra.mxu0 0.0
    %62 = vmatprep.subr.mxu0 0.0
    %63 = vmatpush1.msra.mxu0 0.0
    %64 = vmatprep.subr.mxu0 0.0
    %65 = vmatpush1.msra.mxu0 0.0
    %66 = vmatprep.subr.mxu0 0.0
    %67 = vmatpush1.msra.mxu0 0.0
    %68 = vmatprep.subr.mxu0 0.0
    %69 = vmatpush1.msra.mxu0 0.0
    %70 = vmatprep.subr.mxu0 0.0
    %71 = vmatpush1.msra.mxu0 0.0
    %72 = vmatprep.subr.mxu0 0.0
    %73 = vmatpush1.msra.mxu0 0.0
    %74 = vmatprep.subr.mxu0 0.0
    %75 = vmatpush1.msra.mxu0 0.0
    %76 = vmatprep.subr.mxu0 0.0
    %77 = vmatpush1.msra.mxu0 0.0
    %78 = vmatprep.subr.mxu0 0.0
    %79 = vmatpush1.msra.mxu0 0.0
    %80 = vmatprep.subr.mxu0 0.0
    %81 = vmatpush1.msra.mxu0 0.0
    %82 = vmatprep.subr.mxu0 0.0
    %83 = vmatpush1.msra.mxu0 0.0
    %84 = vmatprep.subr.mxu0 0.0
    %85 = vmatpush1.msra.mxu0 0.0
    %86 = vmatprep.subr.mxu0 0.0
    %87 = vmatpush1.msra.mxu0 0.0
    %88 = vmatprep.subr.mxu0 0.0
    %89 = vmatpush1.msra.mxu0 0.0
    %90 = vmatprep.subr.mxu0 0.0
    %91 = vmatpush1.msra.mxu0 0.0
    %92 = vmatprep.subr.mxu0 0.0
    %93 = vmatpush1.msra.mxu0 0.0
    %94 = vmatprep.subr.mxu0 0.0
    %95 = vmatpush1.msra.mxu0 0.0
    %96 = vmatprep.subr.mxu0 0.0
    %97 = vmatpush1.msra.mxu0 0.0
    %98 = vmatprep.subr.mxu0 0.0
    %99 = vmatpush1.msra.mxu0 0.0
    %100 = vmatprep.subr.mxu0 0.0
    %101 = vmatpush1.msra.mxu0 0.0
    %102 = vmatprep.subr.mxu0 0.0
    %103 = vmatpush1.msra.mxu0 0.0
    %104 = vmatprep.subr.mxu0 0.0
    %105 = vmatpush1.msra.mxu0 0.0
    %106 = vmatprep.subr.mxu0 0.0
    %107 = vmatpush1.msra.mxu0 0.0
    %108 = vmatprep.mubr.f32.mxu0 0.0
    %109 = vmatmul.mubr.f32.gmra.mrb[0].mxu0 %v38
    %v110 = vpop.f32.mrb[0].mxu0
    %v111 = vadd.f32 0.0, %v110
    %v112 = vpop.f32.mrb[0].mxu0
    %113 = vdwg.mxu0
    %vm114 = vcmask 64512
    %v116 = vsel %vm114, %v31, 0
    %118 = vmatprep.subr.mxu0 0.0
    %119 = vmatpush1.msra.mxu0 %v33
    %120 = vmatprep.subr.mxu0 0.0
    %121 = vmatpush1.msra.mxu0 0.0
    %122 = vmatprep.subr.mxu0 0.0
    %123 = vmatpush1.msra.mxu0 0.0
    %124 = vmatprep.subr.mxu0 0.0
    %125 = vmatpush1.msra.mxu0 0.0
    %126 = vmatprep.subr.mxu0 0.0
    %127 = vmatpush1.msra.mxu0 0.0
    %128 = vmatprep.subr.mxu0 0.0
    %129 = vmatpush1.msra.mxu0 0.0
    %130 = vmatprep.subr.mxu0 0.0
    %131 = vmatpush1.msra.mxu0 0.0
    %132 = vmatprep.subr.mxu0 0.0
    %133 = vmatpush1.msra.mxu0 0.0
    %134 = vmatprep.subr.mxu0 0.0
    %135 = vmatpush1.msra.mxu0 0.0
    %136 = vmatprep.subr.mxu0 0.0
    %137 = vmatpush1.msra.mxu0 0.0
    %138 = vmatprep.subr.mxu0 0.0
    %139 = vmatpush1.msra.mxu0 0.0
    %140 = vmatprep.subr.mxu0 0.0
    %141 = vmatpush1.msra.mxu0 0.0
    %142 = vmatprep.subr.mxu0 0.0
    %143 = vmatpush1.msra.mxu0 0.0
    %144 = vmatprep.subr.mxu0 0.0
    %145 = vmatpush1.msra.mxu0 0.0
    %146 = vmatprep.subr.mxu0 0.0
    %147 = vmatpush1.msra.mxu0 0.0
    %148 = vmatprep.subr.mxu0 0.0
    %149 = vmatpush1.msra.mxu0 0.0
    %150 = vmatprep.subr.mxu0 0.0
    %151 = vmatpush1.msra.mxu0 0.0
    %152 = vmatprep.subr.mxu0 0.0
    %153 = vmatpush1.msra.mxu0 0.0
    %154 = vmatprep.subr.mxu0 0.0
    %155 = vmatpush1.msra.mxu0 0.0
    %156 = vmatprep.subr.mxu0 0.0
    %157 = vmatpush1.msra.mxu0 0.0
    %158 = vmatprep.subr.mxu0 0.0
    %159 = vmatpush1.msra.mxu0 0.0
    %160 = vmatprep.subr.mxu0 0.0
    %161 = vmatpush1.msra.mxu0 0.0
    %162 = vmatprep.subr.mxu0 0.0
    %163 = vmatpush1.msra.mxu0 0.0
    %164 = vmatprep.subr.mxu0 0.0
    %165 = vmatpush1.msra.mxu0 0.0
    %166 = vmatprep.subr.mxu0 0.0
    %167 = vmatpush1.msra.mxu0 0.0
    %168 = vmatprep.subr.mxu0 0.0
    %169 = vmatpush1.msra.mxu0 0.0
    %170 = vmatprep.subr.mxu0 0.0
    %171 = vmatpush1.msra.mxu0 0.0
    %172 = vmatprep.subr.mxu0 0.0
    %173 = vmatpush1.msra.mxu0 0.0
    %174 = vmatprep.subr.mxu0 0.0
    %175 = vmatpush1.msra.mxu0 0.0
    %176 = vmatprep.subr.mxu0 0.0
    %177 = vmatpush1.msra.mxu0 0.0
    %178 = vmatprep.subr.mxu0 0.0
    %179 = vmatpush1.msra.mxu0 0.0
    %180 = vmatprep.subr.mxu0 0.0
    %181 = vmatpush1.msra.mxu0 0.0
    %182 = vmatprep.mubr.f32.mxu0 0.0
    %183 = vmatmul.mubr.f32.gmra.mrb[0].mxu0 %v116
    %v184 = vpop.f32.mrb[0].mxu0
    %v185 = vadd.f32 %v111, %v184
    %v186 = vpop.f32.mrb[0].mxu0
    %187 = vdwg.mxu0
    %v188 = vld [vmem:[%s3] sm:$0x1]
    %v189 = vlaneseq
    %v190 = vshrl.u32 %v189, 7
    %v191 = vsub.s32 0, %v190
    %v192 = vrot.slane %v188, %v191
    %v193 = vadd.f32 %v185, %v192
    %v194 = vmax.f32 %v193, 0.0
    %s195 = scalar_lea.vmem [#allocation2], 256
    %v196 = vld [vmem:[%s195] sm:$0xff]
    %v197 = vld [vmem:[%s195 + $0x8] sm:$0xff]
    %v198 = vld [vmem:[%s195 + $0x10] sm:$0xff]
    %v199 = vld [vmem:[%s195 + $0x18] sm:$0xff]
    %v200 = vld [vmem:[%s195 + $0x20] sm:$0xff]
    %v201 = vld [vmem:[%s195 + $0x28] sm:$0xff]
    %v202 = vld [vmem:[%s195 + $0x30] sm:$0xff]
    %v203 = vld [vmem:[%s195 + $0x38] sm:$0xff]
    %v204 = vld [vmem:[%s195 + $0x40] sm:$0xff]
    %v205 = vld [vmem:[%s195 + $0x48] sm:$0xff]
    %v206 = vld [vmem:[%s195 + $0x50] sm:$0xff]
    %v207 = vld [vmem:[%s195 + $0x58] sm:$0xff]
    %v208 = vld [vmem:[%s195 + $0x60] sm:$0xff]
    %v209 = vld [vmem:[%s195 + $0x68] sm:$0xff]
    %v210 = vld [vmem:[%s195 + $0x70] sm:$0xff]
    %v211 = vld [vmem:[%s195 + $0x78] sm:$0xff]
    %v212 = vld [vmem:[%s3 + $0x1] sm:$0x1]
    %v213 = vlaneseq
    %v214 = vshrl.u32 %v213, 7
    %v215 = vsub.s32 0, %v214
    %v216 = vrot.slane %v212, %v215
    %217 = vmatprep.subr.mxu0 0.0
    %218 = vmatpush1.msra.mxu0 %v196
    %219 = vmatprep.subr.mxu0 0.0
    %220 = vmatpush1.msra.mxu0 %v197
    %221 = vmatprep.subr.mxu0 0.0
    %222 = vmatpush1.msra.mxu0 %v198
    %223 = vmatprep.subr.mxu0 0.0
    %224 = vmatpush1.msra.mxu0 %v199
    %225 = vmatprep.subr.mxu0 0.0
    %226 = vmatpush1.msra.mxu0 %v200
    %227 = vmatprep.subr.mxu0 0.0
    %228 = vmatpush1.msra.mxu0 %v201
    %229 = vmatprep.subr.mxu0 0.0
    %230 = vmatpush1.msra.mxu0 %v202
    %231 = vmatprep.subr.mxu0 0.0
    %232 = vmatpush1.msra.mxu0 %v203
    %233 = vmatprep.subr.mxu0 0.0
    %234 = vmatpush1.msra.mxu0 %v204
    %235 = vmatprep.subr.mxu0 0.0
    %236 = vmatpush1.msra.mxu0 %v205
    %237 = vmatprep.subr.mxu0 0.0
    %238 = vmatpush1.msra.mxu0 %v206
    %239 = vmatprep.subr.mxu0 0.0
    %240 = vmatpush1.msra.mxu0 %v207
    %241 = vmatprep.subr.mxu0 0.0
    %242 = vmatpush1.msra.mxu0 %v208
    %243 = vmatprep.subr.mxu0 0.0
    %244 = vmatpush1.msra.mxu0 %v209
    %245 = vmatprep.subr.mxu0 0.0
    %246 = vmatpush1.msra.mxu0 %v210
    %247 = vmatprep.subr.mxu0 0.0
    %248 = vmatpush1.msra.mxu0 %v211
    %249 = vmatprep.subr.mxu0 0.0
    %250 = vmatpush1.msra.mxu0 0.0
    %251 = vmatprep.subr.mxu0 0.0
    %252 = vmatpush1.msra.mxu0 0.0
    %253 = vmatprep.subr.mxu0 0.0
    %254 = vmatpush1.msra.mxu0 0.0
    %255 = vmatprep.subr.mxu0 0.0
    %256 = vmatpush1.msra.mxu0 0.0
    %257 = vmatprep.subr.mxu0 0.0
    %258 = vmatpush1.msra.mxu0 0.0
    %259 = vmatprep.subr.mxu0 0.0
    %260 = vmatpush1.msra.mxu0 0.0
    %261 = vmatprep.subr.mxu0 0.0
    %262 = vmatpush1.msra.mxu0 0.0
    %263 = vmatprep.subr.mxu0 0.0
    %264 = vmatpush1.msra.mxu0 0.0
    %265 = vmatprep.subr.mxu0 0.0
    %266 = vmatpush1.msra.mxu0 0.0
    %267 = vmatprep.subr.mxu0 0.0
    %268 = vmatpush1.msra.mxu0 0.0
    %269 = vmatprep.subr.mxu0 0.0
    %270 = vmatpush1.msra.mxu0 0.0
    %271 = vmatprep.subr.mxu0 0.0
    %272 = vmatpush1.msra.mxu0 0.0
    %273 = vmatprep.subr.mxu0 0.0
    %274 = vmatpush1.msra.mxu0 0.0
    %275 = vmatprep.subr.mxu0 0.0
    %276 = vmatpush1.msra.mxu0 0.0
    %277 = vmatprep.subr.mxu0 0.0
    %278 = vmatpush1.msra.mxu0 0.0
    %279 = vmatprep.subr.mxu0 0.0
    %280 = vmatpush1.msra.mxu0 0.0
    %281 = vmatprep.mubr.f32.mxu0 0.0
    %282 = vmatmul.mubr.f32.gmra.mrb[0].mxu0 %v194
    %v283 = vpop.f32.mrb[0].mxu0
    %v284 = vadd.f32 %v216, %v283
    %v285 = vpop.f32.mrb[0].mxu0
    %286 = vdwg.mxu0
    %v287 = vmax.f32 %v284, 0.0
    %s288 = scalar_lea.vmem [#allocation2], 384
    %v289 = vld [vmem:[%s288] sm:$0xff]
    %v290 = vld [vmem:[%s288 + $0x8] sm:$0xff]
    %v291 = vld [vmem:[%s288 + $0x10] sm:$0xff]
    %v292 = vld [vmem:[%s288 + $0x18] sm:$0xff]
    %v293 = vld [vmem:[%s288 + $0x20] sm:$0xff]
    %v294 = vld [vmem:[%s288 + $0x28] sm:$0xff]
    %v295 = vld [vmem:[%s288 + $0x30] sm:$0xff]
    %v296 = vld [vmem:[%s288 + $0x38] sm:$0xff]
    %v297 = vld [vmem:[%s288 + $0x40] sm:$0xff]
    %v298 = vld [vmem:[%s288 + $0x48] sm:$0xff]
    %v299 = vld [vmem:[%s288 + $0x50] sm:$0xff]
    %v300 = vld [vmem:[%s288 + $0x58] sm:$0xff]
    %v301 = vld [vmem:[%s288 + $0x60] sm:$0xff]
    %v302 = vld [vmem:[%s288 + $0x68] sm:$0xff]
    %v303 = vld [vmem:[%s288 + $0x70] sm:$0xff]
    %v304 = vld [vmem:[%s288 + $0x78] sm:$0xff]
    %v305 = vld [vmem:[%s3 + $0x2] sm:$0x1]
    %v306 = vlaneseq
    %v307 = vshrl.u32 %v306, 7
    %v308 = vsub.s32 0, %v307
    %v309 = vrot.slane %v305, %v308
    %310 = vmatprep.subr.mxu0 0.0
    %311 = vmatpush1.msra.mxu0 %v289
    %312 = vmatprep.subr.mxu0 0.0
    %313 = vmatpush1.msra.mxu0 %v290
    %314 = vmatprep.subr.mxu0 0.0
    %315 = vmatpush1.msra.mxu0 %v291
    %316 = vmatprep.subr.mxu0 0.0
    %317 = vmatpush1.msra.mxu0 %v292
    %318 = vmatprep.subr.mxu0 0.0
    %319 = vmatpush1.msra.mxu0 %v293
    %320 = vmatprep.subr.mxu0 0.0
    %321 = vmatpush1.msra.mxu0 %v294
    %322 = vmatprep.subr.mxu0 0.0
    %323 = vmatpush1.msra.mxu0 %v295
    %324 = vmatprep.subr.mxu0 0.0
    %325 = vmatpush1.msra.mxu0 %v296
    %326 = vmatprep.subr.mxu0 0.0
    %327 = vmatpush1.msra.mxu0 %v297
    %328 = vmatprep.subr.mxu0 0.0
    %329 = vmatpush1.msra.mxu0 %v298
    %330 = vmatprep.subr.mxu0 0.0
    %331 = vmatpush1.msra.mxu0 %v299
    %332 = vmatprep.subr.mxu0 0.0
    %333 = vmatpush1.msra.mxu0 %v300
    %334 = vmatprep.subr.mxu0 0.0
    %335 = vmatpush1.msra.mxu0 %v301
    %336 = vmatprep.subr.mxu0 0.0
    %337 = vmatpush1.msra.mxu0 %v302
    %338 = vmatprep.subr.mxu0 0.0
    %339 = vmatpush1.msra.mxu0 %v303
    %340 = vmatprep.subr.mxu0 0.0
    %341 = vmatpush1.msra.mxu0 %v304
    %342 = vmatprep.subr.mxu0 0.0
    %343 = vmatpush1.msra.mxu0 0.0
    %344 = vmatprep.subr.mxu0 0.0
    %345 = vmatpush1.msra.mxu0 0.0
    %346 = vmatprep.subr.mxu0 0.0
    %347 = vmatpush1.msra.mxu0 0.0
    %348 = vmatprep.subr.mxu0 0.0
    %349 = vmatpush1.msra.mxu0 0.0
    %350 = vmatprep.subr.mxu0 0.0
    %351 = vmatpush1.msra.mxu0 0.0
    %352 = vmatprep.subr.mxu0 0.0
    %353 = vmatpush1.msra.mxu0 0.0
    %354 = vmatprep.subr.mxu0 0.0
    %355 = vmatpush1.msra.mxu0 0.0
    %356 = vmatprep.subr.mxu0 0.0
    %357 = vmatpush1.msra.mxu0 0.0
    %358 = vmatprep.subr.mxu0 0.0
    %359 = vmatpush1.msra.mxu0 0.0
    %360 = vmatprep.subr.mxu0 0.0
    %361 = vmatpush1.msra.mxu0 0.0
    %362 = vmatprep.subr.mxu0 0.0
    %363 = vmatpush1.msra.mxu0 0.0
    %364 = vmatprep.subr.mxu0 0.0
    %365 = vmatpush1.msra.mxu0 0.0
    %366 = vmatprep.subr.mxu0 0.0
    %367 = vmatpush1.msra.mxu0 0.0
    %368 = vmatprep.subr.mxu0 0.0
    %369 = vmatpush1.msra.mxu0 0.0
    %370 = vmatprep.subr.mxu0 0.0
    %371 = vmatpush1.msra.mxu0 0.0
    %372 = vmatprep.subr.mxu0 0.0
    %373 = vmatpush1.msra.mxu0 0.0
    %374 = vmatprep.mubr.f32.mxu0 0.0
    %375 = vmatmul.mubr.f32.gmra.mrb[0].mxu0 %v287
    %v376 = vpop.f32.mrb[0].mxu0
    %v377 = vadd.f32 %v309, %v376
    %v378 = vpop.f32.mrb[0].mxu0
    %379 = vdwg.mxu0
    %vm380 = vcmask 7168
    %381 = vst.msk [vmem:[%s4] sm:$0xff] %vm380, %v377
    // Predicated region
    $region22: #{tpu_custom_call.1} parent=1 // pred_check
      _
    $region23: #{tpu_custom_call.1} parent=1 // pred_check_branch
      %383 = sbr.rel (0) target = $region25
    $region24: #{tpu_custom_call.1} parent=1 // pred_region
      _
    $region25: #{tpu_custom_call.1} parent=1 // pred_fallthru
      _
    // Predicated region
    $region26: #{tpu_custom_call.1} parent=1 // pred_check
      _
    $region27: #{tpu_custom_call.1} parent=1 // pred_check_branch
      %385 = sbr.rel (0) target = $region29
    $region28: #{tpu_custom_call.1} parent=1 // pred_region
      _
    $region29: #{tpu_custom_call.1} parent=1 // pred_fallthru
      _
    %386 = vsyncpa [#allocation3], 1

</llo_original>
